<compile_context>
chip_gen: v7x
topology: tpu7x:2x2x1
jax: 0.10.0
libtpu: 0.0.40
codegen_flags: <defaults>
</compile_context>

<pallas_src>
import jax
import jax.numpy as jnp
from jax.experimental import pallas as pl
from jax.experimental.pallas import tpu as pltpu


_ALIGN = 16  # sublane alignment safe for both f32 (8) and bf16 (16) tiles


def _round_up(x, m):
    return (x + m - 1) // m * m


def _cdiv(a, b):
    return (a + b - 1) // b


def _pick_tile(B, tile_b):
    """Batch tile: multiple of 16, never larger than the array, and (when B is
    large enough) small enough that the grid has >= 2 steps (v7x megacore)."""
    tile_b = max(_ALIGN, tile_b // _ALIGN * _ALIGN)
    if B < _ALIGN:
        return _ALIGN                                   # single (padded) tile
    tb = min(
        tile_b,
        _round_up(_cdiv(B, 2), _ALIGN),                 # >= 2 grid steps
        B // _ALIGN * _ALIGN,                           # block <= array
    )
    return max(tb, _ALIGN)


def mlp_critic_kernel(x_ref, att_ref, w1x_ref, w1a_ref, b1_ref, w2_ref, b2_ref,
                      out_ref):
    """One batch tile of the fused critic forward.

    x_ref   : (TB, resSize)   activation tile (pipelined, bf16/f32)
    att_ref : (TB, attSize)   attribute tile  (pipelined, bf16/f32)
    w1x_ref : (resSize, ndh)  fc1 weight rows for x   (VMEM resident)
    w1a_ref : (attSize, ndh)  fc1 weight rows for att (VMEM resident)
    b1_ref  : (1, ndh)        fc1 bias row  (f32, VMEM resident)
    w2_ref  : (1, ndh)        fc2 weight row (f32, VMEM resident)
    b2_ref  : (1, 1)          fc2 bias scalar (SMEM)
    out_ref : (1, 1, TB)      lane-dense f32 output block (batch -> lanes)
    """
    # fc1 of the *concatenated* input, fused as two MXU matmuls sharing one
    # f32 accumulator (torch.cat never touches HBM).
    z1 = jnp.dot(x_ref[...], w1x_ref[...], preferred_element_type=jnp.float32)
    z1 = z1 + jnp.dot(att_ref[...], w1a_ref[...],
                      preferred_element_type=jnp.float32)
    z1 = z1 + b1_ref[...]

    # LeakyReLU(0.2): one vmul + one vmax (no compare/select pair), in f32.
    a1 = jnp.maximum(z1, 0.2 * z1)

    # fc2 (output width 1): VPU multiply + XLU lane reduction; keeps the MXU
    # free for fc1 and avoids a matmul that uses <1% of the systolic array.
    z2 = jnp.sum(a1 * w2_ref[...], axis=-1) + b2_ref[0, 0]      # (TB,)

    # Lane-dense store of the per-tile result.
    out_ref[...] = z2.reshape(out_ref.shape).astype(out_ref.dtype)


def mlp_critic_forward(x, att, w1, b1, w2, b2, *, tile_b=8192, use_bf16=True):
    """x: (B, resSize), att: (B, attSize) -> (B, 1) float32.

    w1: (resSize+attSize, ndh), b1: (ndh,), w2: (ndh, 1), b2: (1,)
    (nn.Linear weights already transposed to (in, out)).
    """
    B, res = x.shape
    b_att, att_s = att.shape
    assert B == b_att
    d_in, ndh = w1.shape
    assert d_in == res + att_s

    in_dtype = jnp.bfloat16 if use_bf16 else x.dtype

    # Split W1 so the concat is fused into the kernel as two dots.
    w1x = w1[:res, :].astype(in_dtype)
    w1a = w1[res:, :].astype(in_dtype)
    b1_row = b1.reshape(1, ndh).astype(jnp.float32)
    w2_row = w2.reshape(1, ndh).astype(jnp.float32)   # fc2 weight as a row
    b2_s = b2.reshape(1, 1).astype(jnp.float32)       # scalar, passed via SMEM

    x_in = x.astype(in_dtype)
    att_in = att.astype(in_dtype)

    # Batch tiling: no whole-array pad.  The last grid step may see a ragged
    # block (clamped DMA, undefined tail rows) -- those rows never interact
    # with valid rows and are sliced off below.  Only B < 16 pads (tiny).
    tb = _pick_tile(B, tile_b)
    if B < tb:
        x_in = jnp.pad(x_in, ((0, tb - B), (0, 0)))
        att_in = jnp.pad(att_in, ((0, tb - B), (0, 0)))
        n_tiles = 1
    else:
        n_tiles = _cdiv(B, tb)

    # Explicit VMEM budget (double-buffered activation tiles + resident
    # weights + f32 temps), so big tiles stay safe under v7x's 64 MiB physical
    # (32 MiB default scoped) VMEM while still allowing headroom on v5e/v6e.
    in_bytes = jnp.dtype(in_dtype).itemsize
    vmem_est = (
        2 * tb * (res + att_s) * in_bytes          # x/att tiles, 2 buffers each
        + 2 * tb * 4                               # (1, 1, tb) out, 2 buffers
        + 2 * (d_in * ndh * in_bytes + 2 * ndh * 4)  # resident W1 / b1 / w2
        + 3 * tb * ndh * 4                         # z1 / a1 / product temps
    )
    vmem_limit = int(min(max(2 * vmem_est, 32 << 20), 48 << 20))

    out = pl.pallas_call(
        mlp_critic_kernel,
        out_shape=jax.ShapeDtypeStruct((n_tiles, 1, tb), jnp.float32),
        grid=(n_tiles,),
        in_specs=[
            pl.BlockSpec((tb, res), lambda i: (i, 0)),       # x tile (pipelined)
            pl.BlockSpec((tb, att_s), lambda i: (i, 0)),     # att tile (pipelined)
            pl.BlockSpec((res, ndh), lambda i: (0, 0)),      # W1[:res]  resident
            pl.BlockSpec((att_s, ndh), lambda i: (0, 0)),    # W1[res:]  resident
            pl.BlockSpec((1, ndh), lambda i: (0, 0)),        # b1 row    resident
            pl.BlockSpec((1, ndh), lambda i: (0, 0)),        # w2 row    resident
            pl.BlockSpec(memory_space=pltpu.MemorySpace.SMEM),  # b2 scalar
        ],
        # Lane-dense output: one (1, 1, tb) row per grid step.
        out_specs=pl.BlockSpec((1, 1, tb), lambda i: (i, 0, 0)),
        compiler_params=pltpu.CompilerParams(
            dimension_semantics=("parallel",),   # shard batch tiles across TCs (v7x)
            vmem_limit_bytes=vmem_limit,
        ),
    )(x_in, att_in, w1x, w1a, b1_row, w2_row, b2_s)

    # (n_tiles, 1, tb) lane-dense slab -> (B, 1); tail garbage (ragged block /
    # tiny-B pad) lands at flat indices >= B and is dropped here.
    return out.reshape(-1)[:B].reshape(B, 1)


def init_params(key, res_size, att_size, ndh):
    """Deterministic init mirroring weights_init: W ~ N(0, 0.02), b = 0."""
    k1, k2 = jax.random.split(key)
    d_in = res_size + att_size
    w1 = jax.random.normal(k1, (d_in, ndh), jnp.float32) * 0.02
    b1 = jnp.zeros((ndh,), jnp.float32)
    w2 = jax.random.normal(k2, (ndh, 1), jnp.float32) * 0.02
    b2 = jnp.zeros((1,), jnp.float32)
    return w1, b1, w2, b2


def _reference(x, att, w1, b1, w2, b2):
    h = jnp.concatenate([x, att], axis=1)
    z1 = h @ w1 + b1
    a1 = jnp.where(z1 >= 0, z1, 0.2 * z1)
    return a1 @ w2 + b2


if __name__ == "__main__":
    # Small shapes consistent with the module: opt.resSize=32, opt.attSize=16,
    # opt.ndh=32, batch=4.
    B, RES, ATT, NDH = 4, 32, 16, 32

    key = jax.random.PRNGKey(0)
    kx, ka, kp = jax.random.split(key, 3)
    x = jax.random.normal(kx, (B, RES), jnp.float32)
    att = jax.random.normal(ka, (B, ATT), jnp.float32)
    w1, b1, w2, b2 = init_params(kp, RES, ATT, NDH)

    # Exact-dtype path (f32 end to end) -- tight tolerance, tiny-B single tile.
    out = jax.block_until_ready(
        mlp_critic_forward(x, att, w1, b1, w2, b2, use_bf16=False))
    ref = _reference(x, att, w1, b1, w2, b2)
    assert out.shape == (B, 1)
    assert jnp.allclose(out, ref, atol=1e-5, rtol=1e-5)

    # Default fast path (bf16 inputs/W1) on a multi-tile batch that exercises
    # the ragged last block (no whole-array pad) and the >=2-tile grid.
    B2 = 300
    kx2, ka2 = jax.random.split(kx)
    x2 = jax.random.normal(kx2, (B2, RES), jnp.float32)
    att2 = jax.random.normal(ka2, (B2, ATT), jnp.float32)
    out2 = jax.block_until_ready(
        mlp_critic_forward(x2, att2, w1, b1, w2, b2, tile_b=128))
    ref2 = _reference(x2, att2, w1, b1, w2, b2)
    assert out2.shape == (B2, 1)
    assert jnp.allclose(out2, ref2, atol=1e-2, rtol=1e-2)  # bf16 vs f32 reference

    print("KERNEL_OK")
</pallas_src>

<mosaic_0001>
module attributes {stable_mosaic.version = 11 : i64} {
  func.func @mlp_critic_kernel(%arg0: i32, %arg1: memref<16x32xf32, #tpu.memory_space<vmem>>, %arg2: memref<16x16xf32, #tpu.memory_space<vmem>>, %arg3: memref<32x32xf32, #tpu.memory_space<vmem>>, %arg4: memref<16x32xf32, #tpu.memory_space<vmem>>, %arg5: memref<1x32xf32, #tpu.memory_space<vmem>>, %arg6: memref<1x32xf32, #tpu.memory_space<vmem>>, %arg7: memref<1x1xf32, #tpu.memory_space<smem>>, %arg8: memref<1x1x16xf32, #tpu.memory_space<vmem>>) attributes {dimension_semantics = [#tpu.dimension_semantics<parallel>], iteration_bounds = array<i64: 1>, scalar_prefetch = 0 : i64, scratch_operands = 0 : i64, tpu.core_type = #tpu.core_type<tc>, window_params = [{transform_indices = @transform_0, window_bounds = array<i64: 16, 32>}, {transform_indices = @transform_1, window_bounds = array<i64: 16, 16>}, {pipeline_mode = #tpu.pipeline_mode<synchronous>, transform_indices = @transform_2, window_bounds = array<i64: 32, 32>}, {pipeline_mode = #tpu.pipeline_mode<synchronous>, transform_indices = @transform_3, window_bounds = array<i64: 16, 32>}, {pipeline_mode = #tpu.pipeline_mode<synchronous>, transform_indices = @transform_4, window_bounds = array<i64: 1, 32>}, {pipeline_mode = #tpu.pipeline_mode<synchronous>, transform_indices = @transform_5, window_bounds = array<i64: 1, 32>}, {transform_indices = @transform_6, window_bounds = array<i64: 1, 1>}, {transform_indices = @transform_7, window_bounds = array<i64: 1, 1, 16>}]} {
    %c0 = arith.constant 0 : index
    %c0_0 = arith.constant 0 : index
    %0 = vector.load %arg1[%c0, %c0_0] : memref<16x32xf32, #tpu.memory_space<vmem>>, vector<16x32xf32>
    %c0_1 = arith.constant 0 : index
    %c0_2 = arith.constant 0 : index
    %1 = vector.load %arg3[%c0_1, %c0_2] : memref<32x32xf32, #tpu.memory_space<vmem>>, vector<32x32xf32>
    %cst = arith.constant dense<0.000000e+00> : vector<16x32xf32>
    %2 = tpu.matmul %0, %1, %cst {dimension_numbers = #tpu.dot_dimension_numbers<[1], [0], [0], [1], [0, 0, 1, 1], [], []>} : vector<16x32xf32>, vector<32x32xf32>, vector<16x32xf32> -> vector<16x32xf32>
    %c0_3 = arith.constant 0 : index
    %c0_4 = arith.constant 0 : index
    %3 = vector.load %arg2[%c0_3, %c0_4] : memref<16x16xf32, #tpu.memory_space<vmem>>, vector<16x16xf32>
    %c0_5 = arith.constant 0 : index
    %c0_6 = arith.constant 0 : index
    %4 = vector.load %arg4[%c0_5, %c0_6] : memref<16x32xf32, #tpu.memory_space<vmem>>, vector<16x32xf32>
    %cst_7 = arith.constant dense<0.000000e+00> : vector<16x32xf32>
    %5 = tpu.matmul %3, %4, %cst_7 {dimension_numbers = #tpu.dot_dimension_numbers<[1], [0], [0], [1], [0, 0, 1, 1], [], []>} : vector<16x16xf32>, vector<16x32xf32>, vector<16x32xf32> -> vector<16x32xf32>
    %6 = arith.addf %2, %5 : vector<16x32xf32>
    %c0_8 = arith.constant 0 : index
    %c0_9 = arith.constant 0 : index
    %7 = vector.load %arg5[%c0_8, %c0_9] : memref<1x32xf32, #tpu.memory_space<vmem>>, vector<1x32xf32>
    %8 = vector.broadcast %7 : vector<1x32xf32> to vector<16x32xf32>
    %9 = arith.addf %6, %8 : vector<16x32xf32>
    %cst_10 = arith.constant 2.000000e-01 : f32
    %10 = vector.broadcast %cst_10 : f32 to vector<16x32xf32>
    %11 = arith.mulf %10, %9 : vector<16x32xf32>
    %12 = arith.maximumf %9, %11 : vector<16x32xf32>
    %c0_11 = arith.constant 0 : index
    %c0_12 = arith.constant 0 : index
    %13 = vector.load %arg6[%c0_11, %c0_12] : memref<1x32xf32, #tpu.memory_space<vmem>>, vector<1x32xf32>
    %14 = vector.broadcast %13 : vector<1x32xf32> to vector<16x32xf32>
    %15 = arith.mulf %12, %14 : vector<16x32xf32>
    %cst_13 = arith.constant dense<0.000000e+00> : vector<16xf32>
    %16 = vector.multi_reduction <add>, %15, %cst_13 [1] : vector<16x32xf32> to vector<16xf32>
    %c0_14 = arith.constant 0 : index
    %c0_15 = arith.constant 0 : index
    %17 = memref.load %arg7[%c0_14, %c0_15] : memref<1x1xf32, #tpu.memory_space<smem>>
    %18 = vector.broadcast %17 : f32 to vector<16xf32>
    %19 = arith.addf %16, %18 : vector<16xf32>
    %20 = vector.shape_cast %19 : vector<16xf32> to vector<1x1x16xf32>
    %c0_16 = arith.constant 0 : index
    %c0_17 = arith.constant 0 : index
    %c0_18 = arith.constant 0 : index
    %21 = vector.load %arg8[%c0_16, %c0_17, %c0_18] : memref<1x1x16xf32, #tpu.memory_space<vmem>>, vector<1x1x16xf32>
    tpu.vector_store %arg8[%c0_16, %c0_17, %c0_18], %20 {strides = array<i32>} : memref<1x1x16xf32, #tpu.memory_space<vmem>>, vector<1x1x16xf32>,
    return
  }
  func.func @transform_0(%arg0: i32) -> (i32, i32) {
    %c0_i32 = arith.constant 0 : i32
    %c0_i32_0 = arith.constant 0 : i32
    return %arg0, %c0_i32 : i32, i32
  }
  func.func @transform_1(%arg0: i32) -> (i32, i32) {
    %c0_i32 = arith.constant 0 : i32
    %c0_i32_0 = arith.constant 0 : i32
    return %arg0, %c0_i32 : i32, i32
  }
  func.func @transform_2(%arg0: i32) -> (i32, i32) {
    %c0_i32 = arith.constant 0 : i32
    %c0_i32_0 = arith.constant 0 : i32
    %c0_i32_1 = arith.constant 0 : i32
    return %c0_i32, %c0_i32_0 : i32, i32
  }
  func.func @transform_3(%arg0: i32) -> (i32, i32) {
    %c0_i32 = arith.constant 0 : i32
    %c0_i32_0 = arith.constant 0 : i32
    %c0_i32_1 = arith.constant 0 : i32
    return %c0_i32, %c0_i32_0 : i32, i32
  }
  func.func @transform_4(%arg0: i32) -> (i32, i32) {
    %c0_i32 = arith.constant 0 : i32
    %c0_i32_0 = arith.constant 0 : i32
    %c0_i32_1 = arith.constant 0 : i32
    return %c0_i32, %c0_i32_0 : i32, i32
  }
  func.func @transform_5(%arg0: i32) -> (i32, i32) {
    %c0_i32 = arith.constant 0 : i32
    %c0_i32_0 = arith.constant 0 : i32
    %c0_i32_1 = arith.constant 0 : i32
    return %c0_i32, %c0_i32_0 : i32, i32
  }
  func.func @transform_6(%arg0: i32) -> (i32, i32) {
    %c0_i32 = arith.constant 0 : i32
    %c0_i32_0 = arith.constant 0 : i32
    %c0_i32_1 = arith.constant 0 : i32
    return %c0_i32, %c0_i32_0 : i32, i32
  }
  func.func @transform_7(%arg0: i32) -> (i32, i32, i32) {
    %c0_i32 = arith.constant 0 : i32
    %c0_i32_0 = arith.constant 0 : i32
    %c0_i32_1 = arith.constant 0 : i32
    return %arg0, %c0_i32, %c0_i32_0 : i32, i32, i32
  }
}

</mosaic_0001>

<llo_original>
// kernel: tpu_custom_call.1
$region0: #{tpu_custom_call.1}
  #allocation0 [shape = 'u32[]', space=smem, size = 0x4, offset = 0x4, fixed_abs, tag = 'smem constant byte address 0x4 - core index']
  #allocation1 [shape = 'u32[144,128]{1,0:T(1,128)}', space=vmem, size = 0x12000, scoped, tag = 'internal scratch']
  #allocation2 [shape = 'f32[1,1]{1,0:T(1,128)S(6)}', space=smem, size = 0x200, scoped, tag = 'scoped memory for tpu_custom_call.1']
  %s0 = inlined_call_operand.hbm [shape: f32[16,32], index: 0, kind: input, shape index: {}]
  %s1 = inlined_call_operand.hbm [shape: f32[16,16], index: 1, kind: input, shape index: {}]
  %s2 = inlined_call_operand.hbm [shape: f32[32,32], index: 2, kind: input, shape index: {}]
  %s3 = inlined_call_operand.hbm [shape: f32[16,32], index: 3, kind: input, shape index: {}]
  %s4 = inlined_call_operand.vmem [shape: f32[1,32], index: 4, kind: input, shape index: {}]
  %s5 = inlined_call_operand.vmem [shape: f32[1,32], index: 5, kind: input, shape index: {}]
  %s6 = inlined_call_operand.<no memory space> [shape: f32[1,1], index: 6, kind: input, shape index: {}]
  %s7 = inlined_call_operand.hbm [shape: f32[1,1,16], index: 7, kind: output, shape index: {}]
  %s8 = sld [smem:[#allocation0]]
  $region54: #{tpu_custom_call.1} parent=0
    _
  %s10 = ssub.s32 1, %s8
  %s11 = scalar_select 0, %s10, %s8
  %12 = sst [smem:[#allocation2]] %s6
  $region1: #{tpu_custom_call.1} parent=0
    #allocation3 [shape = 'u8[8192]{0}', space=vmem, size = 0x2000, scoped, tag = 'input window, operand 0, single buffered']
    #allocation4 [shape = 's32[1]{0}', space=sflag, size = 0x4, scoped, tag = 'scoped memory for tpu_custom_call.1']
    #allocation5 [shape = 's32[1]{0}', space=sflag, size = 0x4, scoped, tag = 'scoped memory for tpu_custom_call.1']
    #allocation6 [shape = 'u8[8192]{0}', space=vmem, size = 0x2000, scoped, tag = 'input window, operand 1, single buffered']
    #allocation7 [shape = 's32[1]{0}', space=sflag, size = 0x4, scoped, tag = 'scoped memory for tpu_custom_call.1']
    #allocation8 [shape = 'u8[16384]{0}', space=vmem, size = 0x4000, scoped, tag = 'input window, operand 2, single buffered']
    #allocation9 [shape = 'u8[8192]{0}', space=vmem, size = 0x2000, scoped, tag = 'input window, operand 3, single buffered']
    #allocation10 [shape = 's32[1]{0}', space=sflag, size = 0x4, scoped, tag = 'scoped memory for tpu_custom_call.1']
    #allocation11 [shape = 'u8[512]{0}', space=vmem, size = 0x400, scoped, tag = 'output window, operand 0, single buffered']
    %13 = vsyncpa [#allocation4], 0
    %14 = vsyncpa [#allocation7], 0
    %15 = vsyncpa [#allocation10], 0
    %16 = vsyncpa [#allocation5], 0
    // Predicated region
    $region2: #{tpu_custom_call.1} parent=1 // pred_check
      _
    $region3: #{tpu_custom_call.1} parent=1 // pred_check_branch
      %18 = sbr.rel (0) target = $region5
    $region4: #{tpu_custom_call.1} parent=1 // pred_region
      %s20 = ssub.s32 256, 256
      %21 = vsyncadd [#allocation4], %s20
      %s22 = sshll.u32 [#allocation3], 4
      %s23 = int_to_ptr.vmem [resolvable:$true] %s22
      %28 = dma.hbm_to_vmem [thread:$0]  %s0, 256, %s23, [#allocation4], 128, 128, 8
    $region5: #{tpu_custom_call.1} parent=1 // pred_fallthru
      _
    // Predicated region
    $region6: #{tpu_custom_call.1} parent=1 // pred_check
      _
    $region7: #{tpu_custom_call.1} parent=1 // pred_check_branch
      %30 = sbr.rel (0) target = $region9
    $region8: #{tpu_custom_call.1} parent=1 // pred_region
      %s32 = ssub.s32 256, 256
      %33 = vsyncadd [#allocation7], %s32
      %s34 = sshll.u32 [#allocation6], 4
      %s35 = int_to_ptr.vmem [resolvable:$true] %s34
      %40 = dma.hbm_to_vmem [thread:$0]  %s1, 256, %s35, [#allocation7], 128, 128, 8
    $region9: #{tpu_custom_call.1} parent=1 // pred_fallthru
      _
    // Predicated region
    $region10: #{tpu_custom_call.1} parent=1 // pred_check
      _
    $region11: #{tpu_custom_call.1} parent=1 // pred_check_branch
      %42 = sbr.rel (0) target = $region13
    $region12: #{tpu_custom_call.1} parent=1 // pred_region
      %s44 = ssub.s32 512, 512
      %45 = vsyncadd [#allocation7], %s44
      %s46 = sshll.u32 [#allocation8], 4
      %s47 = int_to_ptr.vmem [resolvable:$true] %s46
      %52 = dma.hbm_to_vmem [thread:$0]  %s2, 512, %s47, [#allocation7], 128, 128, 8
    $region13: #{tpu_custom_call.1} parent=1 // pred_fallthru
      _
    // Predicated region
    $region14: #{tpu_custom_call.1} parent=1 // pred_check
      _
    $region15: #{tpu_custom_call.1} parent=1 // pred_check_branch
      %54 = sbr.rel (0) target = $region17
    $region16: #{tpu_custom_call.1} parent=1 // pred_region
      %s56 = ssub.s32 256, 256
      %57 = vsyncadd [#allocation10], %s56
      %s58 = sshll.u32 [#allocation9], 4
      %s59 = int_to_ptr.vmem [resolvable:$true] %s58
      %64 = dma.hbm_to_vmem [thread:$0]  %s3, 256, %s59, [#allocation10], 128, 128, 8
    $region17: #{tpu_custom_call.1} parent=1 // pred_fallthru
      _
    // Predicated region
    $region18: #{tpu_custom_call.1} parent=1 // pred_check
      _
    $region19: #{tpu_custom_call.1} parent=1 // pred_check_branch
      %66 = sbr.rel (0) target = $region21
    $region20: #{tpu_custom_call.1} parent=1 // pred_region
      _
    $region21: #{tpu_custom_call.1} parent=1 // pred_fallthru
      _
    // Predicated region
    $region22: #{tpu_custom_call.1} parent=1 // pred_check
      _
    $region23: #{tpu_custom_call.1} parent=1 // pred_check_branch
      %68 = sbr.rel (0) target = $region25
    $region24: #{tpu_custom_call.1} parent=1 // pred_region
      _
    $region25: #{tpu_custom_call.1} parent=1 // pred_fallthru
      _
    // Predicated region
    $region26: #{tpu_custom_call.1} parent=1 // pred_check
      _
    $region27: #{tpu_custom_call.1} parent=1 // pred_check_branch
      %70 = sbr.rel (0) target = $region29
    $region28: #{tpu_custom_call.1} parent=1 // pred_region
      _
    $region29: #{tpu_custom_call.1} parent=1 // pred_fallthru
      _
    // Predicated region
    $region30: #{tpu_custom_call.1} parent=1 // pred_check
      _
    $region31: #{tpu_custom_call.1} parent=1 // pred_check_branch
      %72 = sbr.rel (0) target = $region33
    $region32: #{tpu_custom_call.1} parent=1 // pred_region
      %73 = dma.done [#allocation4], 256
    $region33: #{tpu_custom_call.1} parent=1 // pred_fallthru
      _
    // Predicated region
    $region34: #{tpu_custom_call.1} parent=1 // pred_check
      _
    $region35: #{tpu_custom_call.1} parent=1 // pred_check_branch
      %75 = sbr.rel (0) target = $region37
    $region36: #{tpu_custom_call.1} parent=1 // pred_region
      %76 = dma.done [#allocation7], 256
    $region37: #{tpu_custom_call.1} parent=1 // pred_fallthru
      _
    // Predicated region
    $region38: #{tpu_custom_call.1} parent=1 // pred_check
      _
    $region39: #{tpu_custom_call.1} parent=1 // pred_check_branch
      %78 = sbr.rel (0) target = $region41
    $region40: #{tpu_custom_call.1} parent=1 // pred_region
      %79 = dma.done [#allocation7], 512
    $region41: #{tpu_custom_call.1} parent=1 // pred_fallthru
      _
    // Predicated region
    $region42: #{tpu_custom_call.1} parent=1 // pred_check
      _
    $region43: #{tpu_custom_call.1} parent=1 // pred_check_branch
      %81 = sbr.rel (0) target = $region45
    $region44: #{tpu_custom_call.1} parent=1 // pred_region
      %82 = dma.done [#allocation10], 256
    $region45: #{tpu_custom_call.1} parent=1 // pred_fallthru
      _
    %v83 = vld [vmem:[#allocation3] sm:$0xff]
    %v84 = vld [vmem:[#allocation3 + $0x8] sm:$0xff]
    %v85 = vld [vmem:[#allocation8] sm:$0xff]
    %v86 = vld [vmem:[#allocation8 + $0x8] sm:$0xff]
    %v87 = vld [vmem:[#allocation8 + $0x10] sm:$0xff]
    %v88 = vld [vmem:[#allocation8 + $0x18] sm:$0xff]
    %v89 = vld [vmem:[#allocation6] sm:$0xff]
    %v90 = vld [vmem:[#allocation6 + $0x8] sm:$0xff]
    %v91 = vld [vmem:[#allocation9] sm:$0xff]
    %v92 = vld [vmem:[#allocation9 + $0x8] sm:$0xff]
    %vm93 = vcmask 130048
    %v95 = vsel %vm93, %v89, 0
    %v98 = vsel %vm93, %v90, 0
    %100 = vmatprep.subr.mxu0 0.0
    %101 = vmatpush1.msra.mxu0 %v91
    %102 = vmatprep.subr.mxu0 0.0
    %103 = vmatpush1.msra.mxu0 %v92
    %104 = vmatprep.subr.mxu0 0.0
    %105 = vmatpush1.msra.mxu0 0.0
    %106 = vmatprep.subr.mxu0 0.0
    %107 = vmatpush1.msra.mxu0 0.0
    %108 = vmatprep.subr.mxu0 0.0
    %109 = vmatpush1.msra.mxu0 0.0
    %110 = vmatprep.subr.mxu0 0.0
    %111 = vmatpush1.msra.mxu0 0.0
    %112 = vmatprep.subr.mxu0 0.0
    %113 = vmatpush1.msra.mxu0 0.0
    %114 = vmatprep.subr.mxu0 0.0
    %115 = vmatpush1.msra.mxu0 0.0
    %116 = vmatprep.subr.mxu0 0.0
    %117 = vmatpush1.msra.mxu0 0.0
    %118 = vmatprep.subr.mxu0 0.0
    %119 = vmatpush1.msra.mxu0 0.0
    %120 = vmatprep.subr.mxu0 0.0
    %121 = vmatpush1.msra.mxu0 0.0
    %122 = vmatprep.subr.mxu0 0.0
    %123 = vmatpush1.msra.mxu0 0.0
    %124 = vmatprep.subr.mxu0 0.0
    %125 = vmatpush1.msra.mxu0 0.0
    %126 = vmatprep.subr.mxu0 0.0
    %127 = vmatpush1.msra.mxu0 0.0
    %128 = vmatprep.subr.mxu0 0.0
    %129 = vmatpush1.msra.mxu0 0.0
    %130 = vmatprep.subr.mxu0 0.0
    %131 = vmatpush1.msra.mxu0 0.0
    %132 = vmatprep.subr.mxu0 0.0
    %133 = vmatpush1.msra.mxu0 0.0
    %134 = vmatprep.subr.mxu0 0.0
    %135 = vmatpush1.msra.mxu0 0.0
    %136 = vmatprep.subr.mxu0 0.0
    %137 = vmatpush1.msra.mxu0 0.0
    %138 = vmatprep.subr.mxu0 0.0
    %139 = vmatpush1.msra.mxu0 0.0
    %140 = vmatprep.subr.mxu0 0.0
    %141 = vmatpush1.msra.mxu0 0.0
    %142 = vmatprep.subr.mxu0 0.0
    %143 = vmatpush1.msra.mxu0 0.0
    %144 = vmatprep.subr.mxu0 0.0
    %145 = vmatpush1.msra.mxu0 0.0
    %146 = vmatprep.subr.mxu0 0.0
    %147 = vmatpush1.msra.mxu0 0.0
    %148 = vmatprep.subr.mxu0 0.0
    %149 = vmatpush1.msra.mxu0 0.0
    %150 = vmatprep.subr.mxu0 0.0
    %151 = vmatpush1.msra.mxu0 0.0
    %152 = vmatprep.subr.mxu0 0.0
    %153 = vmatpush1.msra.mxu0 0.0
    %154 = vmatprep.subr.mxu0 0.0
    %155 = vmatpush1.msra.mxu0 0.0
    %156 = vmatprep.subr.mxu0 0.0
    %157 = vmatpush1.msra.mxu0 0.0
    %158 = vmatprep.subr.mxu0 0.0
    %159 = vmatpush1.msra.mxu0 0.0
    %160 = vmatprep.subr.mxu0 0.0
    %161 = vmatpush1.msra.mxu0 0.0
    %162 = vmatprep.subr.mxu0 0.0
    %163 = vmatpush1.msra.mxu0 0.0
    %164 = vmatprep.mubr.f32.mxu0 0.0
    %165 = vmatmul.mubr.f32.gmra.mrb[0].mxu0 %v95
    %v166 = vpop.f32.mrb[0].mxu0
    %v167 = vadd.f32 0.0, %v166
    %v168 = vpop.f32.mrb[0].mxu0
    %169 = vmatprep.mubr.f32.mxu0 0.0
    %170 = vmatmul.mubr.f32.gmra.mrb[0].mxu0 %v98
    %v171 = vpop.f32.mrb[0].mxu0
    %v172 = vadd.f32 0.0, %v171
    %v173 = vpop.f32.mrb[0].mxu0
    %174 = vdwg.mxu0
    %vm175 = vcmask 261120
    %v177 = vsel %vm175, %v83, 0
    %v180 = vsel %vm175, %v84, 0
    %182 = vmatprep.subr.mxu0 0.0
    %183 = vmatpush1.msra.mxu0 %v85
    %184 = vmatprep.subr.mxu0 0.0
    %185 = vmatpush1.msra.mxu0 %v86
    %186 = vmatprep.subr.mxu0 0.0
    %187 = vmatpush1.msra.mxu0 %v87
    %188 = vmatprep.subr.mxu0 0.0
    %189 = vmatpush1.msra.mxu0 %v88
    %190 = vmatprep.subr.mxu0 0.0
    %191 = vmatpush1.msra.mxu0 0.0
    %192 = vmatprep.subr.mxu0 0.0
    %193 = vmatpush1.msra.mxu0 0.0
    %194 = vmatprep.subr.mxu0 0.0
    %195 = vmatpush1.msra.mxu0 0.0
    %196 = vmatprep.subr.mxu0 0.0
    %197 = vmatpush1.msra.mxu0 0.0
    %198 = vmatprep.subr.mxu0 0.0
    %199 = vmatpush1.msra.mxu0 0.0
    %200 = vmatprep.subr.mxu0 0.0
    %201 = vmatpush1.msra.mxu0 0.0
    %202 = vmatprep.subr.mxu0 0.0
    %203 = vmatpush1.msra.mxu0 0.0
    %204 = vmatprep.subr.mxu0 0.0
    %205 = vmatpush1.msra.mxu0 0.0
    %206 = vmatprep.subr.mxu0 0.0
    %207 = vmatpush1.msra.mxu0 0.0
    %208 = vmatprep.subr.mxu0 0.0
    %209 = vmatpush1.msra.mxu0 0.0
    %210 = vmatprep.subr.mxu0 0.0
    %211 = vmatpush1.msra.mxu0 0.0
    %212 = vmatprep.subr.mxu0 0.0
    %213 = vmatpush1.msra.mxu0 0.0
    %214 = vmatprep.subr.mxu0 0.0
    %215 = vmatpush1.msra.mxu0 0.0
    %216 = vmatprep.subr.mxu0 0.0
    %217 = vmatpush1.msra.mxu0 0.0
    %218 = vmatprep.subr.mxu0 0.0
    %219 = vmatpush1.msra.mxu0 0.0
    %220 = vmatprep.subr.mxu0 0.0
    %221 = vmatpush1.msra.mxu0 0.0
    %222 = vmatprep.subr.mxu0 0.0
    %223 = vmatpush1.msra.mxu0 0.0
    %224 = vmatprep.subr.mxu0 0.0
    %225 = vmatpush1.msra.mxu0 0.0
    %226 = vmatprep.subr.mxu0 0.0
    %227 = vmatpush1.msra.mxu0 0.0
    %228 = vmatprep.subr.mxu0 0.0
    %229 = vmatpush1.msra.mxu0 0.0
    %230 = vmatprep.subr.mxu0 0.0
    %231 = vmatpush1.msra.mxu0 0.0
    %232 = vmatprep.subr.mxu0 0.0
    %233 = vmatpush1.msra.mxu0 0.0
    %234 = vmatprep.subr.mxu0 0.0
    %235 = vmatpush1.msra.mxu0 0.0
    %236 = vmatprep.subr.mxu0 0.0
    %237 = vmatpush1.msra.mxu0 0.0
    %238 = vmatprep.subr.mxu0 0.0
    %239 = vmatpush1.msra.mxu0 0.0
    %240 = vmatprep.subr.mxu0 0.0
    %241 = vmatpush1.msra.mxu0 0.0
    %242 = vmatprep.subr.mxu0 0.0
    %243 = vmatpush1.msra.mxu0 0.0
    %244 = vmatprep.subr.mxu0 0.0
    %245 = vmatpush1.msra.mxu0 0.0
    %246 = vmatprep.mubr.f32.mxu0 0.0
    %247 = vmatmul.mubr.f32.gmra.mrb[0].mxu0 %v177
    %v248 = vpop.f32.mrb[0].mxu0
    %v249 = vadd.f32 %v167, %v248
    %v250 = vpop.f32.mrb[0].mxu0
    %251 = vmatprep.mubr.f32.mxu0 0.0
    %252 = vmatmul.mubr.f32.gmra.mrb[0].mxu0 %v180
    %v253 = vpop.f32.mrb[0].mxu0
    %v254 = vadd.f32 %v172, %v253
    %v255 = vpop.f32.mrb[0].mxu0
    %256 = vdwg.mxu0
    %v257 = vld [vmem:[%s4] sm:$0x1]
    %v259 = vlaneseq
    %v260 = vshrl.u32 %v259, 7
    %v261 = vsub.s32 0, %v260
    %v262 = vrot.slane %v257, %v261
    %v264 = vadd.f32 %v249, %v262
    %v265 = vadd.f32 %v254, %v262
    %v266 = vmul.f32 %v264, 0.2
    %v267 = vmul.f32 %v265, 0.2
    %v268 = vmax.f32 %v264, %v266
    %v269 = vmax.f32 %v265, %v267
    %v270 = vld [vmem:[%s5] sm:$0x1]
    %v272 = vlaneseq
    %v273 = vshrl.u32 %v272, 7
    %v274 = vsub.s32 0, %v273
    %v275 = vrot.slane %v270, %v274
    %v277 = vmul.f32 %v268, %v275
    %v278 = vmul.f32 %v269, %v275
    %v279 = vsel %vm175, %v277, 0.0
    %280 = vadd.xlane.f32.xlu0 %v279
    %v281 = vpop.xlane.xlu0 %280
    %v282 = vsel %vm175, %v278, 0.0
    %283 = vadd.xlane.f32.xlu0 %v282
    %v284 = vpop.xlane.xlu0 %283
    %s285 = sld [smem:[#allocation2]]
    %v286 = vstv %s285
    %v287 = vadd.f32 %v281, %v286
    %v288 = vadd.f32 %v284, %v286
    %v291 = vlaneseq
    %v292 = vand.u32 %v291, 127
    %v293 = vlaneseq
    %v294 = vshrl.u32 %v293, 7
    %v295 = vsub.s32 %v292, %v294
    %v296 = vrot.slane %v287, %v295
    %v297 = vadd.s32 %v292, 4294967288
    %v298 = vlaneseq
    %v299 = vshrl.u32 %v298, 7
    %v300 = vsub.s32 %v297, %v299
    %v301 = vrot.slane %v288, %v300
    %vm302 = vcmask 130112
    %v303 = vsel %vm302, %v301, %v296
    %vm305 = vcmask 122880
    %306 = vst.msk [vmem:[#allocation11] sm:$0x1] %vm305, %v303
    // Predicated region
    $region46: #{tpu_custom_call.1} parent=1 // pred_check
      _
    $region47: #{tpu_custom_call.1} parent=1 // pred_check_branch
      %308 = sbr.rel (0) target = $region49
    $region48: #{tpu_custom_call.1} parent=1 // pred_region
      %s310 = ssub.s32 16, 16
      %311 = vsyncadd [#allocation5], %s310
      %s313 = sshll.u32 [#allocation11], 4
      %s314 = int_to_ptr.vmem [resolvable:$true] %s313
      %316 = dma.vmem_to_hbm [thread:$0]  %s314, 16, %s7, [#allocation5]
    $region49: #{tpu_custom_call.1} parent=1 // pred_fallthru
      _
    // Predicated region
    $region50: #{tpu_custom_call.1} parent=1 // pred_check
      _
    $region51: #{tpu_custom_call.1} parent=1 // pred_check_branch
      %318 = sbr.rel (0) target = $region53
    $region52: #{tpu_custom_call.1} parent=1 // pred_region
      %319 = dma.done [#allocation5], 16
    $region53: #{tpu_custom_call.1} parent=1 // pred_fallthru
      _
    %320 = vsyncpa [#allocation4], 1
    %321 = vsyncpa [#allocation7], 1
    %322 = vsyncpa [#allocation10], 1
    %323 = vsyncpa [#allocation5], 1

</llo_original>
